<compile_context>
chip_gen: v5e
topology: v5e:2x2
jax: 0.10.0
libtpu: 0.0.40
codegen_flags: <defaults>
</compile_context>

<pallas_src>
import jax
import jax.numpy as jnp
from jax import lax
from jax.experimental import pallas as pl
from jax.experimental.pallas import tpu as pltpu


def _cdiv(a, b):
    return -(-a // b)


def _round_up(a, b):
    return _cdiv(a, b) * b


def _make_kernel(n, tm, num_tiles):
    """Kernel closure over the static problem/tile sizes."""

    def kernel(scalars_ref, w_ref, yt_ref, fxt_ref, out_ref):
        # scalars_ref: SMEM (2,) = [rho, expectile]  (scalar prefetch)
        # w_ref:   VMEM (tm, n)      rows [i*tm, i*tm+tm) of W (unpadded, tail masked)
        # yt_ref:  VMEM (k, n_pad)   Y^T, resident every step (matvec RHS + row tiles)
        # fxt_ref: VMEM (k, tm)      f(X)^T row tile
        # out_ref: VMEM (8, 128)     per-tile partial weighted SSE (broadcast-filled)
        rho = scalars_ref[0]
        tau = scalars_ref[1]
        i = pl.program_id(0)

        w_tile = w_ref[...]                              # (tm, n)
        y_full = yt_ref[:, :n]                           # (k, n) static slice drops padded cols

        # (W_tile @ Y)^T = Y^T @ W_tile^T : contract the shared n axis (last of both)
        wy_t = lax.dot_general(
            y_full.astype(w_tile.dtype), w_tile,
            dimension_numbers=(((1,), (1,)), ((), ())),
            preferred_element_type=jnp.float32,
        )                                                # (k, tm), lane-dense

        if num_tiles == 1:
            y_tile = yt_ref[:, :tm]                      # static slice; tm == n_pad
        else:
            row0 = pl.multiple_of(i * tm, 128)           # tm is a multiple of 128 here
            y_tile = yt_ref[:, pl.ds(row0, tm)]
        fx_tile = fxt_ref[...]                           # (k, tm)

        s = y_tile - rho * wy_t - fx_tile                # S^T for this row tile

        # Mask rows past n (the tail W tile reads unspecified rows; Y^T/fX^T pads are 0).
        if not (num_tiles == 1 and tm == n):
            col = lax.broadcasted_iota(jnp.int32, s.shape, dimension=1) + i * tm
            s = jnp.where(col < n, s, 0.0)

        s2 = s * s
        loss_el = jnp.where(s >= 0.0, tau * s2, (1.0 - tau) * s2)

        # lane-dense, per-tile-disjoint output block (safe under "parallel"/megacore)
        out_ref[...] = jnp.full((8, 128), jnp.sum(loss_el), dtype=jnp.float32)

    return kernel


def _tpu_vmem_and_cores():
    """(per-TensorCore VMEM bytes, TensorCores per chip), with safe fallbacks."""
    vmem = 128 << 20
    try:
        vmem = int(pltpu.get_tpu_info().vmem_capacity_bytes)
    except Exception:
        pass
    # 64 MiB/TC chips (v7x) have 2 TensorCores; 128 MiB chips (v5e/v6e) have 1.
    cores = 2 if vmem <= (64 << 20) else 1
    return vmem, cores


def _choose_tiling(n, w_elem_bytes, tile_m):
    """Returns (tm, n_pad, num_tiles, vmem_limit_bytes)."""
    vmem_cap, n_cores = _tpu_vmem_and_cores()
    if vmem_cap >= (100 << 20):          # v5e / v6e: 128 MiB physical VMEM
        vmem_limit = 96 << 20
        w_budget = 72 << 20
    else:                                # v7x: 64 MiB per TensorCore
        vmem_limit = 44 << 20
        w_budget = 32 << 20

    if tile_m is None:
        # Double-buffered W row tiles take most of the budget; subtract the small
        # lane-dense Y^T / fX^T residents plus slack.
        other = 4 * 8 * n * 4 + (1 << 20)
        budget = max(w_budget - other, 2 * 128 * n * w_elem_bytes)
        tm = budget // (2 * n * w_elem_bytes)
    else:
        tm = int(tile_m)

    if n_cores >= 2:
        tm = min(tm, _cdiv(n, 2))        # keep both TensorCores busy

    if tm >= n:                          # single full tile: no padding, no masking
        return n, n, 1, vmem_limit

    tm = max(128, (tm // 128) * 128)     # (k, tm) tile blocks need a lane multiple
    if tm >= n:
        return n, n, 1, vmem_limit
    num_tiles = _cdiv(n, tm)
    if n_cores >= 2 and num_tiles > 1 and num_tiles % 2 == 1:
        # prefer an even tile count so the two TensorCores split evenly
        tm_e = max(128, _round_up(_cdiv(n, num_tiles + 1), 128))
        if tm_e < n and _cdiv(n, tm_e) >= 2:
            tm = tm_e
            num_tiles = _cdiv(n, tm)
    return tm, num_tiles * tm, num_tiles, vmem_limit


def sar_expectile_loss(W, Y, fX, rho, expectile, *, tile_m=None, stream_w_bf16=False):
    """Pallas implementation of SAR_ExpectileLoss.forward (forward value only)."""
    w_dtype = jnp.bfloat16 if stream_w_bf16 else jnp.float32
    W = W.astype(w_dtype)
    Y = Y.astype(jnp.float32)
    fX = fX.astype(jnp.float32)
    n, k = Y.shape

    tm, n_pad, num_tiles, vmem_limit = _choose_tiling(
        n, jnp.dtype(w_dtype).itemsize, tile_m)

    # Transposed (lane-dense for small k) copies of the O(n*k) tensors; padding
    # them along n is cheap. W itself is never padded or copied in HBM.
    Yt = Y.T                               # (k, n)
    fXt = fX.T                             # (k, n)
    pad = n_pad - n
    if pad:
        Yt = jnp.pad(Yt, ((0, 0), (0, pad)))
        fXt = jnp.pad(fXt, ((0, 0), (0, pad)))

    scalars = jnp.array([rho, expectile], dtype=jnp.float32)

    grid_spec = pltpu.PrefetchScalarGridSpec(
        num_scalar_prefetch=1,
        grid=(num_tiles,),
        in_specs=[
            pl.BlockSpec((tm, n), lambda i, s: (i, 0)),       # W row tile (streamed, unpadded)
            pl.BlockSpec((k, n_pad), lambda i, s: (0, 0)),    # Y^T resident
            pl.BlockSpec((k, tm), lambda i, s: (0, i)),       # f(X)^T row tile
        ],
        out_specs=pl.BlockSpec((8, 128), lambda i, s: (i, 0)),
    )

    cost = pl.CostEstimate(
        flops=2 * n * n * k,
        transcendentals=0,
        bytes_accessed=(jnp.dtype(w_dtype).itemsize * n * n
                        + 4 * (2 * k * n_pad + num_tiles * 8 * 128)),
    )

    partials = pl.pallas_call(
        _make_kernel(n, tm, num_tiles),
        out_shape=jax.ShapeDtypeStruct((num_tiles * 8, 128), jnp.float32),
        grid_spec=grid_spec,
        compiler_params=pltpu.CompilerParams(
            dimension_semantics=("parallel",),
            vmem_limit_bytes=vmem_limit,
        ),
        cost_estimate=cost,
    )(scalars, W, Yt, fXt)

    # one broadcast-filled (8,128) block per tile; reduce + normalize exactly once
    total = jnp.sum(partials[::8, 0])
    return total / jnp.float32(n * k)


def reference_loss(W, Y, fX, rho, expectile):
    """Pure-JAX reference mirroring the PyTorch forward (in f32)."""
    n = Y.shape[0]
    G = jnp.eye(n, dtype=jnp.float32) - rho * W.astype(jnp.float32)
    S = G @ Y.astype(jnp.float32) - fX.astype(jnp.float32)
    S2 = S ** 2
    loss = jnp.where(S >= 0, expectile * S2, (1.0 - expectile) * S2)
    return loss.mean()


if __name__ == "__main__":
    key = jax.random.PRNGKey(0)
    k_w, k_y, k_x, k_fw, k_fb = jax.random.split(key, 5)

    n = 300   # spatial units (deliberately NOT a multiple of 128 -> exercises tail masking)
    k = 1     # response columns (torch.mm(G, Y) with Y (n, 1))
    p = 8     # feature dim for f

    rho = 0.3
    expectile = 0.7

    # Spatial weight matrix W (row-normalized-ish), response Y, features X.
    W = jax.random.uniform(k_w, (n, n), dtype=jnp.float32)
    W = W / jnp.sum(W, axis=1, keepdims=True)
    Y = jax.random.normal(k_y, (n, k), dtype=jnp.float32)
    X = jax.random.normal(k_x, (n, p), dtype=jnp.float32)

    # Deterministic synthetic f: a linear layer (stands in for the user network).
    # TODO(synk): the PyTorch forward takes an arbitrary network f; it is evaluated
    #             here in plain JAX glue and passed to the kernel as fX.
    w_f = jax.random.normal(k_fw, (p, k), dtype=jnp.float32) * 0.1
    b_f = jax.random.normal(k_fb, (k,), dtype=jnp.float32) * 0.1
    fX = X @ w_f + b_f

    ref = jax.block_until_ready(reference_loss(W, Y, fX, rho, expectile))

    # auto tiling (single big tile on 1-TC chips / split across TCs on 2-TC chips)
    loss_auto = jax.block_until_ready(sar_expectile_loss(W, Y, fX, rho, expectile))
    # forced small tiles: exercises the multi-tile grid + in-kernel tail mask
    loss_tiled = jax.block_until_ready(
        sar_expectile_loss(W, Y, fX, rho, expectile, tile_m=128))

    assert jnp.allclose(loss_auto, ref, rtol=1e-4, atol=1e-5), (loss_auto, ref)
    assert jnp.allclose(loss_tiled, ref, rtol=1e-4, atol=1e-5), (loss_tiled, ref)
    print("KERNEL_OK")
</pallas_src>

<mosaic_0001>
module attributes {stable_mosaic.version = 11 : i64} {
  func.func @kernel(%arg0: i32, %arg1: memref<2xf32, #tpu.memory_space<smem>>, %arg2: memref<300x300xf32, #tpu.memory_space<vmem>>, %arg3: memref<1x300xf32, #tpu.memory_space<vmem>>, %arg4: memref<1x300xf32, #tpu.memory_space<vmem>>, %arg5: memref<8x128xf32, #tpu.memory_space<vmem>>) attributes {dimension_semantics = [#tpu.dimension_semantics<parallel>], iteration_bounds = array<i64: 1>, scalar_prefetch = 1 : i64, scratch_operands = 0 : i64, tpu.core_type = #tpu.core_type<tc>, window_params = [{transform_indices = @transform_0, window_bounds = array<i64: 300, 300>}, {pipeline_mode = #tpu.pipeline_mode<synchronous>, transform_indices = @transform_1, window_bounds = array<i64: 1, 300>}, {transform_indices = @transform_2, window_bounds = array<i64: 1, 300>}, {transform_indices = @transform_3, window_bounds = array<i64: 8, 128>}]} {
    %c0 = arith.constant 0 : index
    %0 = memref.load %arg1[%c0] : memref<2xf32, #tpu.memory_space<smem>>
    %c1 = arith.constant 1 : index
    %1 = memref.load %arg1[%c1] : memref<2xf32, #tpu.memory_space<smem>>
    %c0_0 = arith.constant 0 : index
    %c0_1 = arith.constant 0 : index
    %2 = vector.load %arg2[%c0_0, %c0_1] : memref<300x300xf32, #tpu.memory_space<vmem>>, vector<300x300xf32>
    %c0_2 = arith.constant 0 : index
    %c0_3 = arith.constant 0 : index
    %3 = vector.load %arg3[%c0_2, %c0_3] : memref<1x300xf32, #tpu.memory_space<vmem>>, vector<1x300xf32>
    %cst = arith.constant dense<0.000000e+00> : vector<1x300xf32>
    %4 = tpu.matmul %3, %2, %cst {dimension_numbers = #tpu.dot_dimension_numbers<[1], [1], [0], [0], [0, 0, 1, 0], [], []>} : vector<1x300xf32>, vector<300x300xf32>, vector<1x300xf32> -> vector<1x300xf32>
    %c0_4 = arith.constant 0 : index
    %c0_5 = arith.constant 0 : index
    %5 = vector.load %arg3[%c0_4, %c0_5] : memref<1x300xf32, #tpu.memory_space<vmem>>, vector<1x300xf32>
    %c0_6 = arith.constant 0 : index
    %c0_7 = arith.constant 0 : index
    %6 = vector.load %arg4[%c0_6, %c0_7] : memref<1x300xf32, #tpu.memory_space<vmem>>, vector<1x300xf32>
    %7 = vector.broadcast %0 : f32 to vector<1x300xf32>
    %8 = arith.mulf %7, %4 : vector<1x300xf32>
    %9 = arith.subf %5, %8 : vector<1x300xf32>
    %10 = arith.subf %9, %6 : vector<1x300xf32>
    %11 = arith.mulf %10, %10 : vector<1x300xf32>
    %cst_8 = arith.constant 0.000000e+00 : f32
    %12 = vector.broadcast %cst_8 : f32 to vector<1x300xf32>
    %13 = arith.cmpf oge, %10, %12 : vector<1x300xf32>
    %14 = vector.broadcast %1 : f32 to vector<1x300xf32>
    %15 = arith.mulf %14, %11 : vector<1x300xf32>
    %cst_9 = arith.constant 1.000000e+00 : f32
    %16 = arith.subf %cst_9, %1 : f32
    %17 = vector.broadcast %16 : f32 to vector<1x300xf32>
    %18 = arith.mulf %17, %11 : vector<1x300xf32>
    %19 = arith.select %13, %15, %18 : vector<1x300xi1>, vector<1x300xf32>
    %20 = vector.shape_cast %19 : vector<1x300xf32> to vector<1x1x300xf32>
    %cst_10 = arith.constant dense<0.000000e+00> : vector<1xf32>
    %21 = vector.multi_reduction <add>, %20, %cst_10 [1, 2] : vector<1x1x300xf32> to vector<1xf32>
    %22 = vector.shape_cast %21 : vector<1xf32> to vector<1x1x1xf32>
    %23 = vector.extract %22[0, 0, 0] : f32 from vector<1x1x1xf32>
    %24 = vector.broadcast %23 : f32 to vector<8x128xf32>
    %c0_11 = arith.constant 0 : index
    %c0_12 = arith.constant 0 : index
    %25 = vector.load %arg5[%c0_11, %c0_12] : memref<8x128xf32, #tpu.memory_space<vmem>>, vector<8x128xf32>
    tpu.vector_store %arg5[%c0_11, %c0_12], %24 {strides = array<i32>} : memref<8x128xf32, #tpu.memory_space<vmem>>, vector<8x128xf32>,
    return
  }
  func.func @transform_0(%arg0: i32, %arg1: memref<2xf32, #tpu.memory_space<smem>>) -> (i32, i32) {
    %c0_i32 = arith.constant 0 : i32
    %c0_i32_0 = arith.constant 0 : i32
    return %arg0, %c0_i32 : i32, i32
  }
  func.func @transform_1(%arg0: i32, %arg1: memref<2xf32, #tpu.memory_space<smem>>) -> (i32, i32) {
    %c0_i32 = arith.constant 0 : i32
    %c0_i32_0 = arith.constant 0 : i32
    %c0_i32_1 = arith.constant 0 : i32
    return %c0_i32, %c0_i32_0 : i32, i32
  }
  func.func @transform_2(%arg0: i32, %arg1: memref<2xf32, #tpu.memory_space<smem>>) -> (i32, i32) {
    %c0_i32 = arith.constant 0 : i32
    %c0_i32_0 = arith.constant 0 : i32
    return %c0_i32, %arg0 : i32, i32
  }
  func.func @transform_3(%arg0: i32, %arg1: memref<2xf32, #tpu.memory_space<smem>>) -> (i32, i32) {
    %c0_i32 = arith.constant 0 : i32
    %c0_i32_0 = arith.constant 0 : i32
    return %arg0, %c0_i32 : i32, i32
  }
}

</mosaic_0001>

<llo_original>
// kernel: tpu_custom_call.1
$region0: #{tpu_custom_call.1}
  #allocation0 [shape = 'u32[]', space=smem, size = 0x4, offset = 0x4, fixed_abs, tag = 'smem constant byte address 0x4 - core index']
  #allocation1 [shape = 'u32[72,128]{1,0:T(1,128)}', space=vmem, size = 0x9000, scoped, tag = 'internal scratch']
  #allocation2 [shape = 's32[1]{0}', space=sflag, size = 0x4, scoped, tag = 'scoped memory for tpu_custom_call.1']
  #allocation3 [shape = 'u8[512]{0}', space=smem, size = 0x200, scoped, tag = 'prefetched SMEM operand 0']
  %s0 = inlined_call_operand.hbm [shape: f32[2], index: 0, kind: input, shape index: {}]
  %s1 = inlined_call_operand.hbm [shape: f32[300,300], index: 1, kind: input, shape index: {}]
  %s2 = inlined_call_operand.hbm [shape: f32[1,300], index: 2, kind: input, shape index: {}]
  %s3 = inlined_call_operand.hbm [shape: f32[1,300], index: 3, kind: input, shape index: {}]
  %s4 = inlined_call_operand.hbm [shape: f32[8,128], index: 4, kind: output, shape index: {}]
  %s5 = sld [smem:[#allocation0]]
  $region34: #{tpu_custom_call.1} parent=0
    _
  %s7 = ssub.s32 1, %s5
  %s8 = scalar_select 0, %s7, %s5
  %s10 = sshll.u32 %s0, 4
  %s11 = int_to_ptr.hbm [resolvable:$true] %s10
  %13 = dma.hbm_to_smem %s11, 16, [#allocation3], [#allocation2]
  %15 = dma.done [#allocation2], 16
  %16 = sfence
  $region1: #{tpu_custom_call.1} parent=0
    #allocation4 [shape = 'u8[466944]{0}', space=vmem, size = 0x72000, scoped, tag = 'input window, operand 1, single buffered']
    #allocation5 [shape = 's32[1]{0}', space=sflag, size = 0x4, scoped, tag = 'scoped memory for tpu_custom_call.1']
    #allocation6 [shape = 's32[1]{0}', space=sflag, size = 0x4, scoped, tag = 'scoped memory for tpu_custom_call.1']
    #allocation7 [shape = 'u8[1536]{0}', space=vmem, size = 0x800, scoped, tag = 'input window, operand 2, single buffered']
    #allocation8 [shape = 's32[1]{0}', space=sflag, size = 0x4, scoped, tag = 'scoped memory for tpu_custom_call.1']
    #allocation9 [shape = 'u8[1536]{0}', space=vmem, size = 0x800, scoped, tag = 'input window, operand 3, single buffered']
    #allocation10 [shape = 'u8[4096]{0}', space=vmem, size = 0x1000, scoped, tag = 'output window, operand 0, single buffered']
    %17 = vsyncpa [#allocation5], 0
    %18 = vsyncpa [#allocation8], 0
    %19 = vsyncpa [#allocation6], 0
    // Predicated region
    $region2: #{tpu_custom_call.1} parent=1 // pred_check
      _
    $region3: #{tpu_custom_call.1} parent=1 // pred_check_branch
      %21 = sbr.rel (0) target = $region5
    $region4: #{tpu_custom_call.1} parent=1 // pred_region
      %23 = vsyncadd [#allocation5], 0
      %s24 = sshll.u32 %s1, 4
      %s25 = int_to_ptr.hbm [resolvable:$true] %s24
      %s26 = sshll.u32 [#allocation4], 4
      %s27 = int_to_ptr.vmem [resolvable:$true] %s26
      %32 = dma.hbm_to_vmem [thread:$0]  %s25, 14592, %s27, [#allocation5], 384, 384, 24
    $region5: #{tpu_custom_call.1} parent=1 // pred_fallthru
      _
    // Predicated region
    $region6: #{tpu_custom_call.1} parent=1 // pred_check
      _
    $region7: #{tpu_custom_call.1} parent=1 // pred_check_branch
      %34 = sbr.rel (0) target = $region9
    $region8: #{tpu_custom_call.1} parent=1 // pred_region
      %36 = vsyncadd [#allocation8], 0
      %s38 = sshll.u32 %s2, 4
      %s39 = int_to_ptr.hbm [resolvable:$true] %s38
      %s40 = sshll.u32 [#allocation7], 4
      %s41 = int_to_ptr.vmem [resolvable:$true] %s40
      %43 = dma.hbm_to_vmem [thread:$0]  %s39, 48, %s41, [#allocation8]
    $region9: #{tpu_custom_call.1} parent=1 // pred_fallthru
      _
    // Predicated region
    $region10: #{tpu_custom_call.1} parent=1 // pred_check
      _
    $region11: #{tpu_custom_call.1} parent=1 // pred_check_branch
      %45 = sbr.rel (0) target = $region13
    $region12: #{tpu_custom_call.1} parent=1 // pred_region
      %47 = vsyncadd [#allocation8], 0
      %s49 = sshll.u32 %s3, 4
      %s50 = int_to_ptr.hbm [resolvable:$true] %s49
      %s51 = sshll.u32 [#allocation9], 4
      %s52 = int_to_ptr.vmem [resolvable:$true] %s51
      %54 = dma.hbm_to_vmem [thread:$0]  %s50, 48, %s52, [#allocation8]
    $region13: #{tpu_custom_call.1} parent=1 // pred_fallthru
      _
    // Predicated region
    $region14: #{tpu_custom_call.1} parent=1 // pred_check
      _
    $region15: #{tpu_custom_call.1} parent=1 // pred_check_branch
      %56 = sbr.rel (0) target = $region17
    $region16: #{tpu_custom_call.1} parent=1 // pred_region
      %58 = dma.done [#allocation5], 14592
    $region17: #{tpu_custom_call.1} parent=1 // pred_fallthru
      _
    // Predicated region
    $region18: #{tpu_custom_call.1} parent=1 // pred_check
      _
    $region19: #{tpu_custom_call.1} parent=1 // pred_check_branch
      %60 = sbr.rel (0) target = $region21
    $region20: #{tpu_custom_call.1} parent=1 // pred_region
      %62 = dma.done [#allocation8], 48
    $region21: #{tpu_custom_call.1} parent=1 // pred_fallthru
      _
    // Predicated region
    $region22: #{tpu_custom_call.1} parent=1 // pred_check
      _
    $region23: #{tpu_custom_call.1} parent=1 // pred_check_branch
      %64 = sbr.rel (0) target = $region25
    $region24: #{tpu_custom_call.1} parent=1 // pred_region
      %66 = dma.done [#allocation8], 48
    $region25: #{tpu_custom_call.1} parent=1 // pred_fallthru
      _
    %s67 = sld [smem:[#allocation3]]
    %s68 = sld [smem:[#allocation3 + $0x1]]
    %v69 = vld [vmem:[#allocation4] sm:$0xff]
    %v70 = vld [vmem:[#allocation4 + $0x8] sm:$0xff]
    %v71 = vld [vmem:[#allocation4 + $0x10] sm:$0xff]
    %v72 = vld [vmem:[#allocation4 + $0x18] sm:$0xff]
    %v73 = vld [vmem:[#allocation4 + $0x20] sm:$0xff]
    %v74 = vld [vmem:[#allocation4 + $0x28] sm:$0xff]
    %v75 = vld [vmem:[#allocation4 + $0x30] sm:$0xff]
    %v76 = vld [vmem:[#allocation4 + $0x38] sm:$0xff]
    %v77 = vld [vmem:[#allocation4 + $0x40] sm:$0xff]
    %v78 = vld [vmem:[#allocation4 + $0x48] sm:$0xff]
    %v79 = vld [vmem:[#allocation4 + $0x50] sm:$0xff]
    %v80 = vld [vmem:[#allocation4 + $0x58] sm:$0xff]
    %v81 = vld [vmem:[#allocation4 + $0x60] sm:$0xff]
    %v82 = vld [vmem:[#allocation4 + $0x68] sm:$0xff]
    %v83 = vld [vmem:[#allocation4 + $0x70] sm:$0xff]
    %v84 = vld [vmem:[#allocation4 + $0x78] sm:$0xff]
    %v85 = vld [vmem:[#allocation4 + $0x80] sm:$0xff]
    %v86 = vld [vmem:[#allocation4 + $0x88] sm:$0xff]
    %v87 = vld [vmem:[#allocation4 + $0x90] sm:$0xff]
    %v88 = vld [vmem:[#allocation4 + $0x98] sm:$0xff]
    %v89 = vld [vmem:[#allocation4 + $0xa0] sm:$0xff]
    %v90 = vld [vmem:[#allocation4 + $0xa8] sm:$0xff]
    %v91 = vld [vmem:[#allocation4 + $0xb0] sm:$0xff]
    %v92 = vld [vmem:[#allocation4 + $0xb8] sm:$0xff]
    %v93 = vld [vmem:[#allocation4 + $0xc0] sm:$0xff]
    %v94 = vld [vmem:[#allocation4 + $0xc8] sm:$0xff]
    %v95 = vld [vmem:[#allocation4 + $0xd0] sm:$0xff]
    %v96 = vld [vmem:[#allocation4 + $0xd8] sm:$0xff]
    %v97 = vld [vmem:[#allocation4 + $0xe0] sm:$0xff]
    %v98 = vld [vmem:[#allocation4 + $0xe8] sm:$0xff]
    %v99 = vld [vmem:[#allocation4 + $0xf0] sm:$0xff]
    %v100 = vld [vmem:[#allocation4 + $0xf8] sm:$0xff]
    %v101 = vld [vmem:[#allocation4 + $0x100] sm:$0xff]
    %v102 = vld [vmem:[#allocation4 + $0x108] sm:$0xff]
    %v103 = vld [vmem:[#allocation4 + $0x110] sm:$0xff]
    %v104 = vld [vmem:[#allocation4 + $0x118] sm:$0xff]
    %v105 = vld [vmem:[#allocation4 + $0x120] sm:$0xff]
    %v106 = vld [vmem:[#allocation4 + $0x128] sm:$0xff]
    %v107 = vld [vmem:[#allocation4 + $0x130] sm:$0xff]
    %v108 = vld [vmem:[#allocation4 + $0x138] sm:$0xff]
    %v109 = vld [vmem:[#allocation4 + $0x140] sm:$0xff]
    %v110 = vld [vmem:[#allocation4 + $0x148] sm:$0xff]
    %v111 = vld [vmem:[#allocation4 + $0x150] sm:$0xff]
    %v112 = vld [vmem:[#allocation4 + $0x158] sm:$0xff]
    %v113 = vld [vmem:[#allocation4 + $0x160] sm:$0xff]
    %v114 = vld [vmem:[#allocation4 + $0x168] sm:$0xff]
    %v115 = vld [vmem:[#allocation4 + $0x170] sm:$0xff]
    %v116 = vld [vmem:[#allocation4 + $0x178] sm:$0xff]
    %v117 = vld [vmem:[#allocation4 + $0x180] sm:$0xff]
    %v118 = vld [vmem:[#allocation4 + $0x188] sm:$0xff]
    %v119 = vld [vmem:[#allocation4 + $0x190] sm:$0xff]
    %v120 = vld [vmem:[#allocation4 + $0x198] sm:$0xff]
    %v121 = vld [vmem:[#allocation4 + $0x1a0] sm:$0xff]
    %v122 = vld [vmem:[#allocation4 + $0x1a8] sm:$0xff]
    %v123 = vld [vmem:[#allocation4 + $0x1b0] sm:$0xff]
    %v124 = vld [vmem:[#allocation4 + $0x1b8] sm:$0xff]
    %v125 = vld [vmem:[#allocation4 + $0x1c0] sm:$0xff]
    %v126 = vld [vmem:[#allocation4 + $0x1c8] sm:$0xff]
    %v127 = vld [vmem:[#allocation4 + $0x1d0] sm:$0xff]
    %v128 = vld [vmem:[#allocation4 + $0x1d8] sm:$0xff]
    %v129 = vld [vmem:[#allocation4 + $0x1e0] sm:$0xff]
    %v130 = vld [vmem:[#allocation4 + $0x1e8] sm:$0xff]
    %v131 = vld [vmem:[#allocation4 + $0x1f0] sm:$0xff]
    %v132 = vld [vmem:[#allocation4 + $0x1f8] sm:$0xff]
    %v133 = vld [vmem:[#allocation4 + $0x200] sm:$0xff]
    %v134 = vld [vmem:[#allocation4 + $0x208] sm:$0xff]
    %v135 = vld [vmem:[#allocation4 + $0x210] sm:$0xff]
    %v136 = vld [vmem:[#allocation4 + $0x218] sm:$0xff]
    %v137 = vld [vmem:[#allocation4 + $0x220] sm:$0xff]
    %v138 = vld [vmem:[#allocation4 + $0x228] sm:$0xff]
    %v139 = vld [vmem:[#allocation4 + $0x230] sm:$0xff]
    %v140 = vld [vmem:[#allocation4 + $0x238] sm:$0xff]
    %v141 = vld [vmem:[#allocation4 + $0x240] sm:$0xff]
    %v142 = vld [vmem:[#allocation4 + $0x248] sm:$0xff]
    %v143 = vld [vmem:[#allocation4 + $0x250] sm:$0xff]
    %v144 = vld [vmem:[#allocation4 + $0x258] sm:$0xff]
    %v145 = vld [vmem:[#allocation4 + $0x260] sm:$0xff]
    %v146 = vld [vmem:[#allocation4 + $0x268] sm:$0xff]
    %v147 = vld [vmem:[#allocation4 + $0x270] sm:$0xff]
    %v148 = vld [vmem:[#allocation4 + $0x278] sm:$0xff]
    %v149 = vld [vmem:[#allocation4 + $0x280] sm:$0xff]
    %v150 = vld [vmem:[#allocation4 + $0x288] sm:$0xff]
    %v151 = vld [vmem:[#allocation4 + $0x290] sm:$0xff]
    %v152 = vld [vmem:[#allocation4 + $0x298] sm:$0xff]
    %v153 = vld [vmem:[#allocation4 + $0x2a0] sm:$0xff]
    %v154 = vld [vmem:[#allocation4 + $0x2a8] sm:$0xff]
    %v155 = vld [vmem:[#allocation4 + $0x2b0] sm:$0xff]
    %v156 = vld [vmem:[#allocation4 + $0x2b8] sm:$0xff]
    %v157 = vld [vmem:[#allocation4 + $0x2c0] sm:$0xff]
    %v158 = vld [vmem:[#allocation4 + $0x2c8] sm:$0xff]
    %v159 = vld [vmem:[#allocation4 + $0x2d0] sm:$0xff]
    %v160 = vld [vmem:[#allocation4 + $0x2d8] sm:$0xff]
    %v161 = vld [vmem:[#allocation4 + $0x2e0] sm:$0xff]
    %v162 = vld [vmem:[#allocation4 + $0x2e8] sm:$0xff]
    %v163 = vld [vmem:[#allocation4 + $0x2f0] sm:$0xff]
    %v164 = vld [vmem:[#allocation4 + $0x2f8] sm:$0xff]
    %v165 = vld [vmem:[#allocation4 + $0x300] sm:$0xff]
    %v166 = vld [vmem:[#allocation4 + $0x308] sm:$0xff]
    %v167 = vld [vmem:[#allocation4 + $0x310] sm:$0xff]
    %v168 = vld [vmem:[#allocation4 + $0x318] sm:$0xff]
    %v169 = vld [vmem:[#allocation4 + $0x320] sm:$0xff]
    %v170 = vld [vmem:[#allocation4 + $0x328] sm:$0xff]
    %v171 = vld [vmem:[#allocation4 + $0x330] sm:$0xff]
    %v172 = vld [vmem:[#allocation4 + $0x338] sm:$0xff]
    %v173 = vld [vmem:[#allocation4 + $0x340] sm:$0xff]
    %v174 = vld [vmem:[#allocation4 + $0x348] sm:$0xff]
    %v175 = vld [vmem:[#allocation4 + $0x350] sm:$0xff]
    %v176 = vld [vmem:[#allocation4 + $0x358] sm:$0xff]
    %v177 = vld [vmem:[#allocation4 + $0x360] sm:$0xff]
    %v178 = vld [vmem:[#allocation4 + $0x368] sm:$0xff]
    %v179 = vld [vmem:[#allocation4 + $0x370] sm:$0xff]
    %v180 = vld [vmem:[#allocation4 + $0x378] sm:$0xf]
    %v181 = vld [vmem:[#allocation4 + $0x380] sm:$0xf]
    %v182 = vld [vmem:[#allocation4 + $0x388] sm:$0xf]
    %v183 = vld [vmem:[#allocation7] sm:$0x7]
    %v185 = vperm.slane %v183, 0
    %v186 = vperm.slane %v183, 1
    %v187 = vperm.slane %v183, 2
    %vm190 = vcmask 359424
    %v191 = vsel %vm190, %v187, 0
    %v194 = vsel %vm190, %v71, 0
    %v197 = vsel %vm190, %v74, 0
    %v200 = vsel %vm190, %v77, 0
    %v203 = vsel %vm190, %v80, 0
    %v206 = vsel %vm190, %v83, 0
    %v209 = vsel %vm190, %v86, 0
    %v212 = vsel %vm190, %v89, 0
    %v215 = vsel %vm190, %v92, 0
    %v218 = vsel %vm190, %v95, 0
    %v221 = vsel %vm190, %v98, 0
    %v224 = vsel %vm190, %v101, 0
    %v227 = vsel %vm190, %v104, 0
    %v230 = vsel %vm190, %v107, 0
    %v233 = vsel %vm190, %v110, 0
    %v236 = vsel %vm190, %v113, 0
    %v239 = vsel %vm190, %v116, 0
    %v242 = vsel %vm190, %v119, 0
    %v245 = vsel %vm190, %v122, 0
    %v248 = vsel %vm190, %v125, 0
    %v251 = vsel %vm190, %v128, 0
    %v254 = vsel %vm190, %v131, 0
    %v257 = vsel %vm190, %v134, 0
    %v260 = vsel %vm190, %v137, 0
    %v263 = vsel %vm190, %v140, 0
    %v266 = vsel %vm190, %v143, 0
    %v269 = vsel %vm190, %v146, 0
    %v272 = vsel %vm190, %v149, 0
    %v275 = vsel %vm190, %v152, 0
    %v278 = vsel %vm190, %v155, 0
    %v281 = vsel %vm190, %v158, 0
    %v284 = vsel %vm190, %v161, 0
    %v287 = vsel %vm190, %v164, 0
    %v290 = vsel %vm190, %v167, 0
    %v293 = vsel %vm190, %v170, 0
    %v296 = vsel %vm190, %v173, 0
    %v299 = vsel %vm190, %v176, 0
    %v302 = vsel %vm190, %v179, 0
    %v305 = vsel %vm190, %v182, 0
    %307 = vmatpush.xpose.msra.mxu0 %v114
    %308 = vmatpush.xpose.msra.mxu0 %v111
    %309 = vmatpush.xpose.msra.mxu0 %v108
    %310 = vmatpush.xpose.msra.mxu0 %v105
    %311 = vmatpush.xpose.msra.mxu0 %v102
    %312 = vmatpush.xpose.msra.mxu0 %v99
    %313 = vmatpush.xpose.msra.mxu0 %v96
    %314 = vmatpush.xpose.msra.mxu0 %v93
    %315 = vmatpush.xpose.msra.mxu0 %v90
    %316 = vmatpush.xpose.msra.mxu0 %v87
    %317 = vmatpush.xpose.msra.mxu0 %v84
    %318 = vmatpush.xpose.msra.mxu0 %v81
    %319 = vmatpush.xpose.msra.mxu0 %v78
    %320 = vmatpush.xpose.msra.mxu0 %v75
    %321 = vmatpush.xpose.msra.mxu0 %v72
    %322 = vmatpush.xpose.msra.mxu0 %v69
    %323 = vmatmul.f32.gmra.mxu0 %v185
    %v324 = vpop.f32.mrf.mxu0
    %v325 = vadd.f32 0.0, %v324
    %326 = vdwg.mxu0
    %327 = vmatpush.xpose.msra.mxu0 %v115
    %328 = vmatpush.xpose.msra.mxu0 %v112
    %329 = vmatpush.xpose.msra.mxu0 %v109
    %330 = vmatpush.xpose.msra.mxu0 %v106
    %331 = vmatpush.xpose.msra.mxu0 %v103
    %332 = vmatpush.xpose.msra.mxu0 %v100
    %333 = vmatpush.xpose.msra.mxu0 %v97
    %334 = vmatpush.xpose.msra.mxu0 %v94
    %335 = vmatpush.xpose.msra.mxu0 %v91
    %336 = vmatpush.xpose.msra.mxu0 %v88
    %337 = vmatpush.xpose.msra.mxu0 %v85
    %338 = vmatpush.xpose.msra.mxu0 %v82
    %339 = vmatpush.xpose.msra.mxu0 %v79
    %340 = vmatpush.xpose.msra.mxu0 %v76
    %341 = vmatpush.xpose.msra.mxu0 %v73
    %342 = vmatpush.xpose.msra.mxu0 %v70
    %343 = vmatmul.f32.gmra.mxu0 %v186
    %v344 = vpop.f32.mrf.mxu0
    %v345 = vadd.f32 %v325, %v344
    %346 = vdwg.mxu0
    %347 = vmatpush.xpose.msra.mxu0 %v239
    %348 = vmatpush.xpose.msra.mxu0 %v236
    %349 = vmatpush.xpose.msra.mxu0 %v233
    %350 = vmatpush.xpose.msra.mxu0 %v230
    %351 = vmatpush.xpose.msra.mxu0 %v227
    %352 = vmatpush.xpose.msra.mxu0 %v224
    %353 = vmatpush.xpose.msra.mxu0 %v221
    %354 = vmatpush.xpose.msra.mxu0 %v218
    %355 = vmatpush.xpose.msra.mxu0 %v215
    %356 = vmatpush.xpose.msra.mxu0 %v212
    %357 = vmatpush.xpose.msra.mxu0 %v209
    %358 = vmatpush.xpose.msra.mxu0 %v206
    %359 = vmatpush.xpose.msra.mxu0 %v203
    %360 = vmatpush.xpose.msra.mxu0 %v200
    %361 = vmatpush.xpose.msra.mxu0 %v197
    %362 = vmatpush.xpose.msra.mxu0 %v194
    %363 = vmatmul.f32.gmra.mxu0 %v191
    %v364 = vpop.f32.mrf.mxu0
    %v365 = vadd.f32 %v345, %v364
    %366 = vdwg.mxu0
    %367 = vmatpush.xpose.msra.mxu0 %v162
    %368 = vmatpush.xpose.msra.mxu0 %v159
    %369 = vmatpush.xpose.msra.mxu0 %v156
    %370 = vmatpush.xpose.msra.mxu0 %v153
    %371 = vmatpush.xpose.msra.mxu0 %v150
    %372 = vmatpush.xpose.msra.mxu0 %v147
    %373 = vmatpush.xpose.msra.mxu0 %v144
    %374 = vmatpush.xpose.msra.mxu0 %v141
    %375 = vmatpush.xpose.msra.mxu0 %v138
    %376 = vmatpush.xpose.msra.mxu0 %v135
    %377 = vmatpush.xpose.msra.mxu0 %v132
    %378 = vmatpush.xpose.msra.mxu0 %v129
    %379 = vmatpush.xpose.msra.mxu0 %v126
    %380 = vmatpush.xpose.msra.mxu0 %v123
    %381 = vmatpush.xpose.msra.mxu0 %v120
    %382 = vmatpush.xpose.msra.mxu0 %v117
    %383 = vmatmul.f32.gmra.mxu0 %v185
    %v384 = vpop.f32.mrf.mxu0
    %v385 = vadd.f32 0.0, %v384
    %386 = vdwg.mxu0
    %387 = vmatpush.xpose.msra.mxu0 %v163
    %388 = vmatpush.xpose.msra.mxu0 %v160
    %389 = vmatpush.xpose.msra.mxu0 %v157
    %390 = vmatpush.xpose.msra.mxu0 %v154
    %391 = vmatpush.xpose.msra.mxu0 %v151
    %392 = vmatpush.xpose.msra.mxu0 %v148
    %393 = vmatpush.xpose.msra.mxu0 %v145
    %394 = vmatpush.xpose.msra.mxu0 %v142
    %395 = vmatpush.xpose.msra.mxu0 %v139
    %396 = vmatpush.xpose.msra.mxu0 %v136
    %397 = vmatpush.xpose.msra.mxu0 %v133
    %398 = vmatpush.xpose.msra.mxu0 %v130
    %399 = vmatpush.xpose.msra.mxu0 %v127
    %400 = vmatpush.xpose.msra.mxu0 %v124
    %401 = vmatpush.xpose.msra.mxu0 %v121
    %402 = vmatpush.xpose.msra.mxu0 %v118
    %403 = vmatmul.f32.gmra.mxu0 %v186
    %v404 = vpop.f32.mrf.mxu0
    %v405 = vadd.f32 %v385, %v404
    %406 = vdwg.mxu0
    %407 = vmatpush.xpose.msra.mxu0 %v287
    %408 = vmatpush.xpose.msra.mxu0 %v284
    %409 = vmatpush.xpose.msra.mxu0 %v281
    %410 = vmatpush.xpose.msra.mxu0 %v278
    %411 = vmatpush.xpose.msra.mxu0 %v275
    %412 = vmatpush.xpose.msra.mxu0 %v272
    %413 = vmatpush.xpose.msra.mxu0 %v269
    %414 = vmatpush.xpose.msra.mxu0 %v266
    %415 = vmatpush.xpose.msra.mxu0 %v263
    %416 = vmatpush.xpose.msra.mxu0 %v260
    %417 = vmatpush.xpose.msra.mxu0 %v257
    %418 = vmatpush.xpose.msra.mxu0 %v254
    %419 = vmatpush.xpose.msra.mxu0 %v251
    %420 = vmatpush.xpose.msra.mxu0 %v248
    %421 = vmatpush.xpose.msra.mxu0 %v245
    %422 = vmatpush.xpose.msra.mxu0 %v242
    %423 = vmatmul.f32.gmra.mxu0 %v191
    %v424 = vpop.f32.mrf.mxu0
    %v425 = vadd.f32 %v405, %v424
    %426 = vdwg.mxu0
    %427 = vmatpush.xpose.msra.mxu0 0.0
    %428 = vmatpush.xpose.msra.mxu0 0.0
    %429 = vmatpush.xpose.msra.mxu0 0.0
    %430 = vmatpush.xpose.msra.mxu0 0.0
    %431 = vmatpush.xpose.msra.mxu0 0.0
    %432 = vmatpush.xpose.msra.mxu0 0.0
    %433 = vmatpush.xpose.msra.mxu0 0.0
    %434 = vmatpush.xpose.msra.mxu0 0.0
    %435 = vmatpush.xpose.msra.mxu0 0.0
    %436 = vmatpush.xpose.msra.mxu0 0.0
    %437 = vmatpush.xpose.msra.mxu0 %v180
    %438 = vmatpush.xpose.msra.mxu0 %v177
    %439 = vmatpush.xpose.msra.mxu0 %v174
    %440 = vmatpush.xpose.msra.mxu0 %v171
    %441 = vmatpush.xpose.msra.mxu0 %v168
    %442 = vmatpush.xpose.msra.mxu0 %v165
    %443 = vmatmul.f32.gmra.mxu0 %v185
    %v444 = vpop.f32.mrf.mxu0
    %v445 = vadd.f32 0.0, %v444
    %446 = vdwg.mxu0
    %447 = vmatpush.xpose.msra.mxu0 0.0
    %448 = vmatpush.xpose.msra.mxu0 0.0
    %449 = vmatpush.xpose.msra.mxu0 0.0
    %450 = vmatpush.xpose.msra.mxu0 0.0
    %451 = vmatpush.xpose.msra.mxu0 0.0
    %452 = vmatpush.xpose.msra.mxu0 0.0
    %453 = vmatpush.xpose.msra.mxu0 0.0
    %454 = vmatpush.xpose.msra.mxu0 0.0
    %455 = vmatpush.xpose.msra.mxu0 0.0
    %456 = vmatpush.xpose.msra.mxu0 0.0
    %457 = vmatpush.xpose.msra.mxu0 %v181
    %458 = vmatpush.xpose.msra.mxu0 %v178
    %459 = vmatpush.xpose.msra.mxu0 %v175
    %460 = vmatpush.xpose.msra.mxu0 %v172
    %461 = vmatpush.xpose.msra.mxu0 %v169
    %462 = vmatpush.xpose.msra.mxu0 %v166
    %463 = vmatmul.f32.gmra.mxu0 %v186
    %v464 = vpop.f32.mrf.mxu0
    %v465 = vadd.f32 %v445, %v464
    %466 = vdwg.mxu0
    %467 = vmatpush.xpose.msra.mxu0 0.0
    %468 = vmatpush.xpose.msra.mxu0 0.0
    %469 = vmatpush.xpose.msra.mxu0 0.0
    %470 = vmatpush.xpose.msra.mxu0 0.0
    %471 = vmatpush.xpose.msra.mxu0 0.0
    %472 = vmatpush.xpose.msra.mxu0 0.0
    %473 = vmatpush.xpose.msra.mxu0 0.0
    %474 = vmatpush.xpose.msra.mxu0 0.0
    %475 = vmatpush.xpose.msra.mxu0 0.0
    %476 = vmatpush.xpose.msra.mxu0 0.0
    %477 = vmatpush.xpose.msra.mxu0 %v305
    %478 = vmatpush.xpose.msra.mxu0 %v302
    %479 = vmatpush.xpose.msra.mxu0 %v299
    %480 = vmatpush.xpose.msra.mxu0 %v296
    %481 = vmatpush.xpose.msra.mxu0 %v293
    %482 = vmatpush.xpose.msra.mxu0 %v290
    %483 = vmatmul.f32.gmra.mxu0 %v191
    %v484 = vpop.f32.mrf.mxu0
    %v485 = vadd.f32 %v465, %v484
    %486 = vdwg.mxu0
    %v487 = vld [vmem:[#allocation9] sm:$0x7]
    %v488 = vstv %s67
    %v489 = vmul.f32 %v488, %v365
    %v490 = vmul.f32 %v488, %v425
    %v491 = vmul.f32 %v488, %v485
    %v495 = vrot.slane %v490, 7
    %v496 = vrot.slane %v491, 6
    %vm497 = vcmask 1040384
    %v498 = vsel %vm497, %v489, %v495
    %vm499 = vcmask 1041408
    %v500 = vsel %vm499, %v498, %v496
    %v502 = vsub.f32 %v183, %v500
    %v503 = vsub.f32 %v502, %v487
    %v504 = vmul.f32 %v503, %v503
    %vm505 = vcmp.ge.f32.partialorder %v503, 0.0
    %v506 = vstv %s68
    %v507 = vmul.f32 %v506, %v504
    %s508 = ssub.f32 1.0, %s68
    %v509 = vstv %s508
    %v510 = vmul.f32 %v509, %v504
    %v511 = vsel %vm505, %v507, %v510
    %v513 = vperm.slane %v511, 0
    %v514 = vperm.slane %v511, 1
    %v515 = vperm.slane %v511, 2
    %v519 = vsel %vm497, %v513, 0.0
    %v520 = vsel %vm497, %v514, 0.0
    %v521 = vadd.f32 %v519, %v520
    %vm522 = vcmask 352256
    %v523 = vsel %vm522, %v515, 0.0
    %v524 = vadd.f32 %v521, %v523
    %525 = vadd.xlane.f32.xlu0 %v524
    %v526 = vpop.xlane.xlu0 %525
    %v527 = vrot.slane %v526, 4
    %v528 = vadd.f32 %v526, %v527
    %v529 = vrot.slane %v528, 2
    %v530 = vadd.f32 %v528, %v529
    %v531 = vrot.slane %v530, 1
    %v532 = vadd.f32 %v530, %v531
    %s533 = vtos %v532
    %v534 = vstv %s533
    %535 = vst [vmem:[#allocation10] sm:$0xff] %v534
    // Predicated region
    $region26: #{tpu_custom_call.1} parent=1 // pred_check
      _
    $region27: #{tpu_custom_call.1} parent=1 // pred_check_branch
      %537 = sbr.rel (0) target = $region29
    $region28: #{tpu_custom_call.1} parent=1 // pred_region
      %539 = vsyncadd [#allocation6], 0
      %s541 = sshll.u32 [#allocation10], 4
      %s542 = int_to_ptr.vmem [resolvable:$true] %s541
      %s543 = sshll.u32 %s4, 4
      %s544 = int_to_ptr.hbm [resolvable:$true] %s543
      %546 = dma.vmem_to_hbm [thread:$0]  %s542, 128, %s544, [#allocation6]
    $region29: #{tpu_custom_call.1} parent=1 // pred_fallthru
      _
    // Predicated region
    $region30: #{tpu_custom_call.1} parent=1 // pred_check
      _
    $region31: #{tpu_custom_call.1} parent=1 // pred_check_branch
      %548 = sbr.rel (0) target = $region33
    $region32: #{tpu_custom_call.1} parent=1 // pred_region
      %550 = dma.done [#allocation6], 128
    $region33: #{tpu_custom_call.1} parent=1 // pred_fallthru
      _
    %551 = vsyncpa [#allocation5], 1
    %552 = vsyncpa [#allocation8], 1
    %553 = vsyncpa [#allocation6], 1

</llo_original>
